<compile_context>
chip_gen: v7x
topology: tpu7x:2x2x1
jax: 0.10.0
libtpu: 0.0.40
codegen_flags: <defaults>
</compile_context>

<pallas_src>
import math

import numpy as np
import jax
import jax.numpy as jnp
from jax.experimental import pallas as pl
from jax.experimental.pallas import tpu as pltpu


def _cdiv(a, b):
    return -(-a // b)


def _round_up(x, m):
    return _cdiv(x, m) * m


def _vmem_budget():
    """Generation-aware (tile budget, scoped VMEM limit) in bytes."""
    try:
        cap = int(pltpu.get_tpu_info().vmem_capacity_bytes)
    except Exception:
        cap = 64 * 1024 * 1024           # conservative fallback (v7x per-TC size)
    budget = int(cap * 0.55)             # tiles + resident weight/bias
    limit = int(cap * 0.75)              # scoped limit, keep headroom
    return budget, limit


def _choose_tn(c2, cin, w_item, budget):
    """Column tile over the 2*Cout axis (full width unless the weight is huge)."""
    if c2 % 128 != 0 or 2 * (2 * cin * c2) * w_item <= budget // 2:
        return c2
    tn = c2
    while tn % 256 == 0 and 2 * (2 * cin * tn) * w_item > budget // 2:
        tn //= 2                         # stays a multiple of 128 and a divisor of c2
    return tn


def _choose_th(r_rows, w_img, cin, in_item, out_item, w_item, tn, budget):
    """Row tile (in image rows) for the (N*H) axis."""
    g = 8 // math.gcd(w_img, 8)          # keep th*W a multiple of 8 (sublane align)
    # double-buffered x block + out block, per image row of the grid
    per_row = 2 * w_img * (cin * in_item + 2 * tn * out_item)
    # weight + bias blocks (pipeline reserves 2 buffers even though grid-invariant)
    fixed = 2 * (2 * cin * tn * w_item + 4 * tn)
    avail = max(budget - fixed, per_row * g)
    th = max(g, (avail // per_row) // g * g)
    # keep >= ~4 grid steps (megacore sharding on v7x + DMA/compute overlap)
    th = min(th, max(g, _round_up(_cdiv(r_rows, 4), g)))
    th = min(th, _round_up(r_rows, g))
    # shrink to the smallest tile with the same step count -> minimal row padding
    steps = _cdiv(r_rows, th)
    th = max(g, _round_up(_cdiv(r_rows, steps), g))
    return th


def _make_upconv_kernel(compute_dtype):
    def kernel(x_ref, w_ref, b_ref, o_ref):
        # x_ref: (th*W, Cin), w_ref: (2, Cin, tn), b_ref: (1, tn),
        # o_ref: (th, 2, W, tn)   [columns within a slab: dj*Cout + oc]
        x = x_ref[...]
        if compute_dtype is not None and x.dtype != compute_dtype:
            x = x.astype(compute_dtype)          # in-kernel VPU cast (no extra HBM pass)
        bias = b_ref[...].astype(jnp.float32)    # (1, tn), f32 add
        th, _, w_img, tn = o_ref.shape
        for di in range(2):                      # static unroll: 2 MXU matmuls
            acc = jnp.dot(x, w_ref[di], preferred_element_type=jnp.float32)
            acc = acc + bias
            o_ref[:, di, :, :] = acc.reshape(th, w_img, tn).astype(o_ref.dtype)
    return kernel


def upconv2x2_nhwc(x_nhwc, weight, bias, *, compute_dtype=None):
    """ConvTranspose2d(kernel_size=2, stride=2) on an NHWC input (no transposes).

    x_nhwc: (N, H, W, Cin). weight: (Cin, Cout, 2, 2) (PyTorch layout).
    bias: (Cout,). Returns (N, 2H, 2W, Cout) in x_nhwc.dtype.
    compute_dtype=jnp.bfloat16 halves weight VMEM / MXU input width on any TPU
    generation (f32 accumulation kept).
    """
    N, H, W, Cin = x_nhwc.shape
    Cout = weight.shape[1]
    out_dtype = x_nhwc.dtype
    C2 = 2 * Cout

    # (Cin, Cout, 2, 2) [c, oc, di, dj] -> (di, Cin, dj*Cout + oc)
    w_arr = jnp.transpose(weight, (2, 0, 3, 1)).reshape(2, Cin, C2)
    if compute_dtype is not None:
        w_arr = w_arr.astype(compute_dtype)
    b_arr = jnp.tile(bias.astype(jnp.float32), 2).reshape(1, C2)

    budget, vmem_limit = _vmem_budget()
    in_item = jnp.dtype(x_nhwc.dtype).itemsize
    w_item = jnp.dtype(w_arr.dtype).itemsize
    out_item = jnp.dtype(out_dtype).itemsize

    tn = _choose_tn(C2, Cin, w_item, budget)
    R = N * H
    th = _choose_th(R, W, Cin, in_item, out_item, w_item, tn, budget)

    Rp = _round_up(R, th)
    x_flat = x_nhwc.reshape(N * H * W, Cin)
    if Rp != R:
        x_flat = jnp.pad(x_flat, ((0, (Rp - R) * W), (0, 0)))

    grid = (Rp // th, C2 // tn)          # column axis innermost -> x block reused
    Mp = Rp * W
    cost = pl.CostEstimate(
        flops=4 * Mp * Cin * C2,
        transcendentals=0,
        bytes_accessed=(Mp * Cin * in_item
                        + 2 * Cin * C2 * w_item
                        + Mp * 2 * C2 * out_item),
    )

    out = pl.pallas_call(
        _make_upconv_kernel(compute_dtype),
        out_shape=jax.ShapeDtypeStruct((Rp, 2, W, C2), out_dtype),
        grid=grid,
        in_specs=[
            pl.BlockSpec((th * W, Cin), lambda i, j: (i, 0)),
            pl.BlockSpec((2, Cin, tn), lambda i, j: (0, 0, j)),
            pl.BlockSpec((1, tn), lambda i, j: (0, j)),
        ],
        out_specs=pl.BlockSpec((th, 2, W, tn), lambda i, j: (i, 0, 0, j)),
        compiler_params=pltpu.CompilerParams(
            dimension_semantics=("parallel", "parallel"),
            vmem_limit_bytes=vmem_limit,
        ),
        cost_estimate=cost,
    )(x_flat, w_arr, b_arr)

    if Rp != R:
        out = out[:R]
    # (N*H, 2, W, 2*Cout) is bit-exact a reshape of (N, 2H, 2W, Cout): no transpose.
    return out.reshape(N, 2 * H, 2 * W, Cout)


def unet_up_block_upconv(x, weight, bias, *, compute_dtype=None):
    """PyTorch-convention entry point (compatibility shim only).

    x: (N, Cin, H, W) NCHW. weight: (Cin, Cout, 2, 2). bias: (Cout,).
    Returns (N, Cout, 2H, 2W). If the surrounding model is NHWC, call
    upconv2x2_nhwc directly and skip both boundary transposes.
    """
    x_nhwc = jnp.transpose(x, (0, 2, 3, 1))
    out_nhwc = upconv2x2_nhwc(x_nhwc, weight, bias, compute_dtype=compute_dtype)
    return jnp.transpose(out_nhwc, (0, 3, 1, 2))


def _reference(x, weight, bias):
    # Pure-JAX reference for ConvTranspose2d(k=2, s=2) in NCHW.
    N, Cin, H, W = x.shape
    Cout = weight.shape[1]
    y = jnp.einsum("nchw,codk->nohdwk", x, weight)
    y = y.reshape(N, Cout, 2 * H, 2 * W) + bias[None, :, None, None]
    return y


if __name__ == "__main__":
    key = jax.random.PRNGKey(0)

    # Main config: batch=2, in_size=8, out_size=4, spatial=16 (f32 path).
    N, Cin, Cout, H, W = 2, 8, 4, 16, 16
    kx, kw, kb = jax.random.split(key, 3)
    x = jax.random.normal(kx, (N, Cin, H, W), dtype=jnp.float32)
    weight = 0.1 * jax.random.normal(kw, (Cin, Cout, 2, 2), dtype=jnp.float32)
    bias = 0.01 * jax.random.normal(kb, (Cout,), dtype=jnp.float32)

    out = jax.block_until_ready(unet_up_block_upconv(x, weight, bias))
    ref = _reference(x, weight, bias)
    assert out.shape == (N, Cout, 2 * H, 2 * W), out.shape
    np.testing.assert_allclose(np.asarray(out), np.asarray(ref),
                               rtol=1e-5, atol=1e-5)

    # Row-padding path (N*H not a multiple of the row tile), f32.
    N2, H2, W2 = 1, 5, 16
    x2 = jax.random.normal(kx, (N2, Cin, H2, W2), dtype=jnp.float32)
    out2 = jax.block_until_ready(unet_up_block_upconv(x2, weight, bias))
    ref2 = _reference(x2, weight, bias)
    assert out2.shape == (N2, Cout, 2 * H2, 2 * W2), out2.shape
    np.testing.assert_allclose(np.asarray(out2), np.asarray(ref2),
                               rtol=1e-5, atol=1e-5)

    # bf16 compute path (in-kernel activation cast, f32 accumulation).
    out_bf16 = jax.block_until_ready(
        unet_up_block_upconv(x, weight, bias, compute_dtype=jnp.bfloat16))
    np.testing.assert_allclose(np.asarray(out_bf16), np.asarray(ref),
                               rtol=5e-2, atol=5e-2)

    print("KERNEL_OK")
</pallas_src>

<mosaic_0001>
module attributes {stable_mosaic.version = 11 : i64} {
  func.func @kernel(%arg0: i32, %arg1: i32, %arg2: memref<128x8xf32, #tpu.memory_space<vmem>>, %arg3: memref<2x8x8xf32, #tpu.memory_space<vmem>>, %arg4: memref<1x8xf32, #tpu.memory_space<vmem>>, %arg5: memref<8x2x16x8xf32, #tpu.memory_space<vmem>>) attributes {dimension_semantics = [#tpu.dimension_semantics<parallel>, #tpu.dimension_semantics<parallel>], iteration_bounds = array<i64: 4, 1>, scalar_prefetch = 0 : i64, scratch_operands = 0 : i64, tpu.core_type = #tpu.core_type<tc>, window_params = [{transform_indices = @transform_0, window_bounds = array<i64: 128, 8>}, {transform_indices = @transform_1, window_bounds = array<i64: 2, 8, 8>}, {transform_indices = @transform_2, window_bounds = array<i64: 1, 8>}, {transform_indices = @transform_3, window_bounds = array<i64: 8, 2, 16, 8>}]} {
    %c0 = arith.constant 0 : index
    %c0_0 = arith.constant 0 : index
    %0 = vector.load %arg2[%c0, %c0_0] : memref<128x8xf32, #tpu.memory_space<vmem>>, vector<128x8xf32>
    %c0_1 = arith.constant 0 : index
    %c0_2 = arith.constant 0 : index
    %1 = vector.load %arg4[%c0_1, %c0_2] : memref<1x8xf32, #tpu.memory_space<vmem>>, vector<1x8xf32>
    %c0_3 = arith.constant 0 : index
    %c0_4 = arith.constant 0 : index
    %c0_5 = arith.constant 0 : index
    %2 = vector.load %arg3[%c0_3, %c0_4, %c0_5] : memref<2x8x8xf32, #tpu.memory_space<vmem>>, vector<1x8x8xf32>
    %3 = vector.shape_cast %2 : vector<1x8x8xf32> to vector<8x8xf32>
    %cst = arith.constant dense<0.000000e+00> : vector<128x8xf32>
    %4 = tpu.matmul %0, %3, %cst {dimension_numbers = #tpu.dot_dimension_numbers<[1], [0], [0], [1], [0, 0, 1, 1], [], []>} : vector<128x8xf32>, vector<8x8xf32>, vector<128x8xf32> -> vector<128x8xf32>
    %5 = vector.broadcast %1 : vector<1x8xf32> to vector<128x8xf32>
    %6 = arith.addf %4, %5 : vector<128x8xf32>
    %7 = vector.shape_cast %6 : vector<128x8xf32> to vector<8x16x8xf32>
    %c0_6 = arith.constant 0 : index
    %c0_7 = arith.constant 0 : index
    %c0_8 = arith.constant 0 : index
    %c0_9 = arith.constant 0 : index
    %8 = vector.load %arg5[%c0_6, %c0_7, %c0_8, %c0_9] : memref<8x2x16x8xf32, #tpu.memory_space<vmem>>, vector<8x1x16x8xf32>
    %9 = vector.shape_cast %8 : vector<8x1x16x8xf32> to vector<8x16x8xf32>
    %10 = vector.shape_cast %7 : vector<8x16x8xf32> to vector<8x1x16x8xf32>
    tpu.vector_store %arg5[%c0_6, %c0_7, %c0_8, %c0_9], %10 {strides = array<i32>} : memref<8x2x16x8xf32, #tpu.memory_space<vmem>>, vector<8x1x16x8xf32>,
    %c1 = arith.constant 1 : index
    %c0_10 = arith.constant 0 : index
    %c0_11 = arith.constant 0 : index
    %11 = vector.load %arg3[%c1, %c0_10, %c0_11] : memref<2x8x8xf32, #tpu.memory_space<vmem>>, vector<1x8x8xf32>
    %12 = vector.shape_cast %11 : vector<1x8x8xf32> to vector<8x8xf32>
    %cst_12 = arith.constant dense<0.000000e+00> : vector<128x8xf32>
    %13 = tpu.matmul %0, %12, %cst_12 {dimension_numbers = #tpu.dot_dimension_numbers<[1], [0], [0], [1], [0, 0, 1, 1], [], []>} : vector<128x8xf32>, vector<8x8xf32>, vector<128x8xf32> -> vector<128x8xf32>
    %14 = vector.broadcast %1 : vector<1x8xf32> to vector<128x8xf32>
    %15 = arith.addf %13, %14 : vector<128x8xf32>
    %16 = vector.shape_cast %15 : vector<128x8xf32> to vector<8x16x8xf32>
    %c0_13 = arith.constant 0 : index
    %c1_14 = arith.constant 1 : index
    %c0_15 = arith.constant 0 : index
    %c0_16 = arith.constant 0 : index
    %17 = vector.load %arg5[%c0_13, %c1_14, %c0_15, %c0_16] : memref<8x2x16x8xf32, #tpu.memory_space<vmem>>, vector<8x1x16x8xf32>
    %18 = vector.shape_cast %17 : vector<8x1x16x8xf32> to vector<8x16x8xf32>
    %19 = vector.shape_cast %16 : vector<8x16x8xf32> to vector<8x1x16x8xf32>
    tpu.vector_store %arg5[%c0_13, %c1_14, %c0_15, %c0_16], %19 {strides = array<i32>} : memref<8x2x16x8xf32, #tpu.memory_space<vmem>>, vector<8x1x16x8xf32>,
    return
  }
  func.func @transform_0(%arg0: i32, %arg1: i32) -> (i32, i32) {
    %c0_i32 = arith.constant 0 : i32
    %c0_i32_0 = arith.constant 0 : i32
    return %arg0, %c0_i32 : i32, i32
  }
  func.func @transform_1(%arg0: i32, %arg1: i32) -> (i32, i32, i32) {
    %c0_i32 = arith.constant 0 : i32
    %c0_i32_0 = arith.constant 0 : i32
    %c0_i32_1 = arith.constant 0 : i32
    return %c0_i32, %c0_i32_0, %arg1 : i32, i32, i32
  }
  func.func @transform_2(%arg0: i32, %arg1: i32) -> (i32, i32) {
    %c0_i32 = arith.constant 0 : i32
    %c0_i32_0 = arith.constant 0 : i32
    return %c0_i32, %arg1 : i32, i32
  }
  func.func @transform_3(%arg0: i32, %arg1: i32) -> (i32, i32, i32, i32) {
    %c0_i32 = arith.constant 0 : i32
    %c0_i32_0 = arith.constant 0 : i32
    %c0_i32_1 = arith.constant 0 : i32
    return %arg0, %c0_i32, %c0_i32_0, %arg1 : i32, i32, i32, i32
  }
}

</mosaic_0001>

<llo_original>
// kernel: tpu_custom_call.1
$region0: #{tpu_custom_call.1}
  #allocation0 [shape = 'u32[]', space=smem, size = 0x4, offset = 0x4, fixed_abs, tag = 'smem constant byte address 0x4 - core index']
  #allocation1 [shape = 'u32[144,128]{1,0:T(1,128)}', space=vmem, size = 0x12000, scoped, tag = 'internal scratch']
  %s0 = inlined_call_operand.vmem [shape: f32[512,8], index: 0, kind: input, shape index: {}]
  %s1 = inlined_call_operand.vmem [shape: f32[2,8,8], index: 1, kind: input, shape index: {}]
  %s2 = inlined_call_operand.vmem [shape: f32[1,8], index: 2, kind: input, shape index: {}]
  %s3 = inlined_call_operand.vmem [shape: f32[32,2,16,8], index: 3, kind: output, shape index: {}]
  %s4 = sld [smem:[#allocation0]]
  $region45: #{tpu_custom_call.1} parent=0
    _
  %s6 = ssub.s32 1, %s4
  %s7 = scalar_select 0, %s6, %s4
  loop: start=0, step=1, limit=6
  $region2: #{tpu_custom_call.1} parent=0 // loop_pre_header
    _
  $region3: #{tpu_custom_call.1} parent=0 // loop_header
    %s9 = sphi 0, %s13
    %p10 = scmp.ge.s32.totalorder %s9, 6
    %s16 = sphi 0, %s28
    %s17 = sphi 0, %s24
    %s18 = sphi 0, %s16
    %s19 = sphi 0, %s17
    %s20 = sphi 0, %s18
    %s21 = sphi 0, %s19
    %s31 = sphi 0, %s33
    %s34 = sphi 0, %s31
    %s35 = sphi 0, %s34
    %s51 = sphi 0, %s35
    %s57 = sphi 0, %s59
    %s60 = sphi 0, %s57
    %s61 = sphi 0, %s60
    %s77 = sphi 0, %s61
    %s83 = sphi 0, %s85
    %s86 = sphi 0, %s83
    %s87 = sphi 0, %s86
    %s103 = sphi 0, %s87
    %s111 = sphi 0, %s113
    %s114 = sphi 0, %s111
    %s115 = sphi 0, %s114
    %s131 = sphi 0, %s115
  $region4: #{tpu_custom_call.1} parent=0 // loop_header_branch
    %12 = sbr.rel (%p10) target = $region8
  $region5: #{tpu_custom_call.1} parent=0 // loop_body
    %s14 = ssub.s32 %s9, 1
    %s15 = ssub.s32 %s9, 2
    %s22 = sadd.s32 1, %s17
    %p23 = scmp.ge.s32.totalorder %s22, 1
    %s24 = scalar_select %p23, 0, %s22
    %s25 = sadd.s32 1, %s16
    %s26 = scalar_select %p23, %s25, %s16
    %p27 = scmp.ge.s32.totalorder %s26, 4
    %s28 = scalar_select %p27, 0, %s26
    %s29 = ssub.s32 %s16, %s28
    %p30 = scmp.eq.s32.totalorder %s29, 0
    %s32 = sadd.s32 %s31, 1
    %s33 = scalar_select %p30, %s31, %s32
    %p36 = pneg %p30
    %p37 = scmp.eq.s32.totalorder %s9, 3
    %p38 = por %p36, %p37
    %p39 = scmp.ne.s32.totalorder %s31, %s34
    %p40 = scmp.eq.s32.totalorder %s9, 0
    %p41 = por %p39, %p40
    %p42 = scmp.ne.s32.totalorder %s31, %s34
    %p43 = scmp.eq.s32.totalorder %s14, 3
    %p44 = por %p42, %p43
    %p45 = scmp.ne.s32.totalorder %s34, %s35
    %p46 = scmp.eq.s32.totalorder %s14, 0
    %p47 = por %p45, %p46
    %p48 = scmp.ne.s32.totalorder %s34, %s35
    %p49 = scmp.eq.s32.totalorder %s15, 3
    %p50 = por %p48, %p49
    %p52 = scmp.ne.s32.totalorder %s35, %s51
    %p53 = scmp.eq.s32.totalorder %s15, 0
    %p54 = por %p52, %p53
    %s55 = ssub.s32 %s17, %s24
    %p56 = scmp.eq.s32.totalorder %s55, 0
    %s58 = sadd.s32 %s57, 1
    %s59 = scalar_select %p56, %s57, %s58
    %p62 = pneg %p56
    %p63 = scmp.eq.s32.totalorder %s9, 3
    %p64 = por %p62, %p63
    %p65 = scmp.ne.s32.totalorder %s57, %s60
    %p66 = scmp.eq.s32.totalorder %s9, 0
    %p67 = por %p65, %p66
    %p68 = scmp.ne.s32.totalorder %s57, %s60
    %p69 = scmp.eq.s32.totalorder %s14, 3
    %p70 = por %p68, %p69
    %p71 = scmp.ne.s32.totalorder %s60, %s61
    %p72 = scmp.eq.s32.totalorder %s14, 0
    %p73 = por %p71, %p72
    %p74 = scmp.ne.s32.totalorder %s60, %s61
    %p75 = scmp.eq.s32.totalorder %s15, 3
    %p76 = por %p74, %p75
    %p78 = scmp.ne.s32.totalorder %s61, %s77
    %p79 = scmp.eq.s32.totalorder %s15, 0
    %p80 = por %p78, %p79
    %s81 = ssub.s32 %s17, %s24
    %p82 = scmp.eq.s32.totalorder %s81, 0
    %s84 = sadd.s32 %s83, 1
    %s85 = scalar_select %p82, %s83, %s84
    %p88 = pneg %p82
    %p89 = scmp.eq.s32.totalorder %s9, 3
    %p90 = por %p88, %p89
    %p91 = scmp.ne.s32.totalorder %s83, %s86
    %p92 = scmp.eq.s32.totalorder %s9, 0
    %p93 = por %p91, %p92
    %p94 = scmp.ne.s32.totalorder %s83, %s86
    %p95 = scmp.eq.s32.totalorder %s14, 3
    %p96 = por %p94, %p95
    %p97 = scmp.ne.s32.totalorder %s86, %s87
    %p98 = scmp.eq.s32.totalorder %s14, 0
    %p99 = por %p97, %p98
    %p100 = scmp.ne.s32.totalorder %s86, %s87
    %p101 = scmp.eq.s32.totalorder %s15, 3
    %p102 = por %p100, %p101
    %p104 = scmp.ne.s32.totalorder %s87, %s103
    %p105 = scmp.eq.s32.totalorder %s15, 0
    %p106 = por %p104, %p105
    %s107 = ssub.s32 %s16, %s28
    %s108 = ssub.s32 %s17, %s24
    %s109 = sor.u32 %s107, %s108
    %p110 = scmp.eq.s32.totalorder %s109, 0
    %s112 = sadd.s32 %s111, 1
    %s113 = scalar_select %p110, %s111, %s112
    %p116 = pneg %p110
    %p117 = scmp.eq.s32.totalorder %s9, 3
    %p118 = por %p116, %p117
    %p119 = scmp.ne.s32.totalorder %s111, %s114
    %p120 = scmp.eq.s32.totalorder %s9, 0
    %p121 = por %p119, %p120
    %p122 = scmp.ne.s32.totalorder %s111, %s114
    %p123 = scmp.eq.s32.totalorder %s14, 3
    %p124 = por %p122, %p123
    %p125 = scmp.ne.s32.totalorder %s114, %s115
    %p126 = scmp.eq.s32.totalorder %s14, 0
    %p127 = por %p125, %p126
    %p128 = scmp.ne.s32.totalorder %s114, %s115
    %p129 = scmp.eq.s32.totalorder %s15, 3
    %p130 = por %p128, %p129
    %p132 = scmp.ne.s32.totalorder %s115, %s131
    %p133 = scmp.eq.s32.totalorder %s15, 0
    %p134 = por %p132, %p133
    %p135 = scmp.le.s32.totalorder 1, %s9
    %p136 = scmp.lt.s32.totalorder %s9, 5
    %p137 = pnand %p135, %p136
    %p138 = pneg %p137
    // Predicated region
    $region9: #{tpu_custom_call.1} parent=5 // pred_check
      _
    $region10: #{tpu_custom_call.1} parent=5 // pred_check_branch
      %140 = sbr.rel (%p137) target = $region12
    $region11: #{tpu_custom_call.1} parent=5 // pred_region
      %s141 = ssub.s32 %s9, 1
      // Predicated region
      $region13: #{tpu_custom_call.1} parent=11 // pred_check
        %p142 = pneg %p73
      $region14: #{tpu_custom_call.1} parent=11 // pred_check_branch
        %144 = sbr.rel (%p142) target = $region16
      $region15: #{tpu_custom_call.1} parent=11 // pred_region
        %p145 = scmp.lt.s32.totalorder %s19, 0
        %s146 = scalar_select %p145, %s19, 0
        %s147 = smul.addr %s146, 8
        %s148 = scalar_lea.vmem %s1, %s147
      $region16: #{tpu_custom_call.1} parent=11 // pred_fallthru
        _
      // Predicated region
      $region17: #{tpu_custom_call.1} parent=11 // pred_check
        %p149 = pneg %p99
      $region18: #{tpu_custom_call.1} parent=11 // pred_check_branch
        %151 = sbr.rel (%p149) target = $region20
      $region19: #{tpu_custom_call.1} parent=11 // pred_region
        %p152 = scmp.lt.s32.totalorder %s19, 0
        %s153 = scalar_select %p152, %s19, 0
        %s154 = scalar_lea.vmem %s2, %s153
      $region20: #{tpu_custom_call.1} parent=11 // pred_fallthru
        _
    $region12: #{tpu_custom_call.1} parent=5 // pred_fallthru
      _
    %p155 = scmp.lt.s32.totalorder %s9, 4
    // Predicated region
    $region21: #{tpu_custom_call.1} parent=5 // pred_check
      %p156 = pneg %p155
    $region22: #{tpu_custom_call.1} parent=5 // pred_check_branch
      %158 = sbr.rel (%p156) target = $region24
    $region23: #{tpu_custom_call.1} parent=5 // pred_region
      // Predicated region
      $region25: #{tpu_custom_call.1} parent=23 // pred_check
        %p159 = pneg %p41
      $region26: #{tpu_custom_call.1} parent=23 // pred_check_branch
        %161 = sbr.rel (%p159) target = $region28
      $region27: #{tpu_custom_call.1} parent=23 // pred_region
        %s162 = smul.u32 16, %s16
        %p163 = scmp.lt.s32.totalorder %s162, 63
        %s164 = scalar_select %p163, %s162, 63
        %s165 = smul.addr %s164, 8
        %s166 = scalar_lea.vmem %s0, %s165
        %s167 = smul.u32 16, %s16
      $region28: #{tpu_custom_call.1} parent=23 // pred_fallthru
        _
    $region24: #{tpu_custom_call.1} parent=5 // pred_fallthru
      _
    %p168 = scmp.le.s32.totalorder 1, %s9
    %p169 = scmp.lt.s32.totalorder %s9, 5
    %p170 = pnand %p168, %p169
    %p171 = pneg %p170
    // Predicated region
    $region29: #{tpu_custom_call.1} parent=5 // pred_check
      _
    $region30: #{tpu_custom_call.1} parent=5 // pred_check_branch
      %173 = sbr.rel (%p170) target = $region32
    $region31: #{tpu_custom_call.1} parent=5 // pred_region
      %s174 = ssub.s32 %s9, 1
      %s175 = smul.u32 16, %s18
      %p176 = scmp.lt.s32.totalorder %s175, 63
      %s177 = scalar_select %p176, %s175, 63
      %s178 = smul.addr %s177, 8
      %s179 = scalar_lea.vmem %s0, %s178
      %p180 = pneg %p47
      %p181 = pneg %p44
      %p182 = scmp.lt.s32.totalorder %s19, 0
      %s183 = scalar_select %p182, %s19, 0
      %s184 = smul.addr %s183, 8
      %s185 = scalar_lea.vmem %s1, %s184
      %p186 = pneg %p73
      %p187 = pneg %p70
      %p188 = scmp.lt.s32.totalorder %s19, 0
      %s189 = scalar_select %p188, %s19, 0
      %s190 = scalar_lea.vmem %s2, %s189
      %p191 = pneg %p99
      %p192 = pneg %p96
      %p193 = pneg %p127
      %p194 = pneg %p124
      %s195 = smul.u32 8, %s18
      %p196 = scmp.lt.s32.totalorder %s195, 31
      %s197 = scalar_select %p196, %s195, 31
      %p198 = scmp.lt.s32.totalorder %s19, 0
      %s199 = scalar_select %p198, %s19, 0
      %s200 = smul.addr %s197, 4
      %s201 = sadd.s32 %s199, %s200
      %s202 = smul.addr %s201, 8
      %s203 = scalar_lea.vmem %s3, %s202
      %s204 = smul.u32 16, %s18
      %p205 = scmp.lt.s32.totalorder %s204, 63
      %s206 = scalar_select %p205, %s204, 63
      %s207 = smul.addr %s206, 8
      %s208 = scalar_lea.vmem %s0, %s207
      %s209 = smul.u32 16, %s18
      %p210 = scmp.lt.s32.totalorder %s19, 0
      %s211 = scalar_select %p210, %s19, 0
      %s212 = smul.addr %s211, 8
      %s213 = scalar_lea.vmem %s1, %s212
      %p214 = scmp.lt.s32.totalorder %s19, 0
      %s215 = scalar_select %p214, %s19, 0
      %s216 = scalar_lea.vmem %s2, %s215
      %s217 = smul.u32 8, %s18
      %p218 = scmp.lt.s32.totalorder %s217, 31
      %s219 = scalar_select %p218, %s217, 31
      %p220 = scmp.lt.s32.totalorder %s19, 0
      %s221 = scalar_select %p220, %s19, 0
      %s222 = smul.addr %s219, 4
      %s223 = sadd.s32 %s221, %s222
      %s224 = smul.addr %s223, 8
      %s225 = scalar_lea.vmem %s3, %s224
      %s226 = smul.u32 8, %s18
      %v227 = vld [vmem:[%s208] sm:$0xff]
      %v228 = vld [vmem:[%s208 + $0x8] sm:$0xff]
      %v229 = vld [vmem:[%s208 + $0x10] sm:$0xff]
      %v230 = vld [vmem:[%s208 + $0x18] sm:$0xff]
      %v231 = vld [vmem:[%s208 + $0x20] sm:$0xff]
      %v232 = vld [vmem:[%s208 + $0x28] sm:$0xff]
      %v233 = vld [vmem:[%s208 + $0x30] sm:$0xff]
      %v234 = vld [vmem:[%s208 + $0x38] sm:$0xff]
      %v235 = vld [vmem:[%s208 + $0x40] sm:$0xff]
      %v236 = vld [vmem:[%s208 + $0x48] sm:$0xff]
      %v237 = vld [vmem:[%s208 + $0x50] sm:$0xff]
      %v238 = vld [vmem:[%s208 + $0x58] sm:$0xff]
      %v239 = vld [vmem:[%s208 + $0x60] sm:$0xff]
      %v240 = vld [vmem:[%s208 + $0x68] sm:$0xff]
      %v241 = vld [vmem:[%s208 + $0x70] sm:$0xff]
      %v242 = vld [vmem:[%s208 + $0x78] sm:$0xff]
      %v243 = vld [vmem:[%s216] sm:$0x1]
      %v244 = vld [vmem:[%s213] sm:$0xff]
      %v246 = vlaneseq
      %v247 = vshrl.u32 %v246, 7
      %v248 = vsub.s32 0, %v247
      %v249 = vrot.slane %v243, %v248
      %vm251 = vcmask 64512
      %v253 = vsel %vm251, %v227, 0
      %v256 = vsel %vm251, %v228, 0
      %v259 = vsel %vm251, %v229, 0
      %v262 = vsel %vm251, %v230, 0
      %v265 = vsel %vm251, %v231, 0
      %v268 = vsel %vm251, %v232, 0
      %v271 = vsel %vm251, %v233, 0
      %v274 = vsel %vm251, %v234, 0
      %v277 = vsel %vm251, %v235, 0
      %v280 = vsel %vm251, %v236, 0
      %v283 = vsel %vm251, %v237, 0
      %v286 = vsel %vm251, %v238, 0
      %v289 = vsel %vm251, %v239, 0
      %v292 = vsel %vm251, %v240, 0
      %v295 = vsel %vm251, %v241, 0
      %v298 = vsel %vm251, %v242, 0
      %300 = vmatprep.subr.mxu0 0.0
      %301 = vmatpush1.msra.mxu0 %v244
      %302 = vmatprep.subr.mxu0 0.0
      %303 = vmatpush1.msra.mxu0 0.0
      %304 = vmatprep.subr.mxu0 0.0
      %305 = vmatpush1.msra.mxu0 0.0
      %306 = vmatprep.subr.mxu0 0.0
      %307 = vmatpush1.msra.mxu0 0.0
      %308 = vmatprep.subr.mxu0 0.0
      %309 = vmatpush1.msra.mxu0 0.0
      %310 = vmatprep.subr.mxu0 0.0
      %311 = vmatpush1.msra.mxu0 0.0
      %312 = vmatprep.subr.mxu0 0.0
      %313 = vmatpush1.msra.mxu0 0.0
      %314 = vmatprep.subr.mxu0 0.0
      %315 = vmatpush1.msra.mxu0 0.0
      %316 = vmatprep.subr.mxu0 0.0
      %317 = vmatpush1.msra.mxu0 0.0
      %318 = vmatprep.subr.mxu0 0.0
      %319 = vmatpush1.msra.mxu0 0.0
      %320 = vmatprep.subr.mxu0 0.0
      %321 = vmatpush1.msra.mxu0 0.0
      %322 = vmatprep.subr.mxu0 0.0
      %323 = vmatpush1.msra.mxu0 0.0
      %324 = vmatprep.subr.mxu0 0.0
      %325 = vmatpush1.msra.mxu0 0.0
      %326 = vmatprep.subr.mxu0 0.0
      %327 = vmatpush1.msra.mxu0 0.0
      %328 = vmatprep.subr.mxu0 0.0
      %329 = vmatpush1.msra.mxu0 0.0
      %330 = vmatprep.subr.mxu0 0.0
      %331 = vmatpush1.msra.mxu0 0.0
      %332 = vmatprep.subr.mxu0 0.0
      %333 = vmatpush1.msra.mxu0 0.0
      %334 = vmatprep.subr.mxu0 0.0
      %335 = vmatpush1.msra.mxu0 0.0
      %336 = vmatprep.subr.mxu0 0.0
      %337 = vmatpush1.msra.mxu0 0.0
      %338 = vmatprep.subr.mxu0 0.0
      %339 = vmatpush1.msra.mxu0 0.0
      %340 = vmatprep.subr.mxu0 0.0
      %341 = vmatpush1.msra.mxu0 0.0
      %342 = vmatprep.subr.mxu0 0.0
      %343 = vmatpush1.msra.mxu0 0.0
      %344 = vmatprep.subr.mxu0 0.0
      %345 = vmatpush1.msra.mxu0 0.0
      %346 = vmatprep.subr.mxu0 0.0
      %347 = vmatpush1.msra.mxu0 0.0
      %348 = vmatprep.subr.mxu0 0.0
      %349 = vmatpush1.msra.mxu0 0.0
      %350 = vmatprep.subr.mxu0 0.0
      %351 = vmatpush1.msra.mxu0 0.0
      %352 = vmatprep.subr.mxu0 0.0
      %353 = vmatpush1.msra.mxu0 0.0
      %354 = vmatprep.subr.mxu0 0.0
      %355 = vmatpush1.msra.mxu0 0.0
      %356 = vmatprep.subr.mxu0 0.0
      %357 = vmatpush1.msra.mxu0 0.0
      %358 = vmatprep.subr.mxu0 0.0
      %359 = vmatpush1.msra.mxu0 0.0
      %360 = vmatprep.subr.mxu0 0.0
      %361 = vmatpush1.msra.mxu0 0.0
      %362 = vmatprep.subr.mxu0 0.0
      %363 = vmatpush1.msra.mxu0 0.0
      %364 = vmatprep.mubr.f32.mxu0 0.0
      %365 = vmatmul.mubr.f32.gmra.mrb[0].mxu0 %v253
      %v366 = vpop.f32.mrb[0].mxu0
      %v367 = vadd.f32 %v249, %v366
      %v368 = vpop.f32.mrb[0].mxu0
      %369 = vmatprep.mubr.f32.mxu0 0.0
      %370 = vmatmul.mubr.f32.gmra.mrb[0].mxu0 %v256
      %v371 = vpop.f32.mrb[0].mxu0
      %v372 = vadd.f32 %v249, %v371
      %v373 = vpop.f32.mrb[0].mxu0
      %374 = vmatprep.mubr.f32.mxu0 0.0
      %375 = vmatmul.mubr.f32.gmra.mrb[0].mxu0 %v259
      %v376 = vpop.f32.mrb[0].mxu0
      %v377 = vadd.f32 %v249, %v376
      %v378 = vpop.f32.mrb[0].mxu0
      %379 = vmatprep.mubr.f32.mxu0 0.0
      %380 = vmatmul.mubr.f32.gmra.mrb[0].mxu0 %v262
      %v381 = vpop.f32.mrb[0].mxu0
      %v382 = vadd.f32 %v249, %v381
      %v383 = vpop.f32.mrb[0].mxu0
      %384 = vmatprep.mubr.f32.mxu0 0.0
      %385 = vmatmul.mubr.f32.gmra.mrb[0].mxu0 %v265
      %v386 = vpop.f32.mrb[0].mxu0
      %v387 = vadd.f32 %v249, %v386
      %v388 = vpop.f32.mrb[0].mxu0
      %389 = vmatprep.mubr.f32.mxu0 0.0
      %390 = vmatmul.mubr.f32.gmra.mrb[0].mxu0 %v268
      %v391 = vpop.f32.mrb[0].mxu0
      %v392 = vadd.f32 %v249, %v391
      %v393 = vpop.f32.mrb[0].mxu0
      %394 = vmatprep.mubr.f32.mxu0 0.0
      %395 = vmatmul.mubr.f32.gmra.mrb[0].mxu0 %v271
      %v396 = vpop.f32.mrb[0].mxu0
      %v397 = vadd.f32 %v249, %v396
      %v398 = vpop.f32.mrb[0].mxu0
      %399 = vmatprep.mubr.f32.mxu0 0.0
      %400 = vmatmul.mubr.f32.gmra.mrb[0].mxu0 %v274
      %v401 = vpop.f32.mrb[0].mxu0
      %v402 = vadd.f32 %v249, %v401
      %v403 = vpop.f32.mrb[0].mxu0
      %404 = vmatprep.mubr.f32.mxu0 0.0
      %405 = vmatmul.mubr.f32.gmra.mrb[0].mxu0 %v277
      %v406 = vpop.f32.mrb[0].mxu0
      %v407 = vadd.f32 %v249, %v406
      %v408 = vpop.f32.mrb[0].mxu0
      %409 = vmatprep.mubr.f32.mxu0 0.0
      %410 = vmatmul.mubr.f32.gmra.mrb[0].mxu0 %v280
      %v411 = vpop.f32.mrb[0].mxu0
      %v412 = vadd.f32 %v249, %v411
      %v413 = vpop.f32.mrb[0].mxu0
      %414 = vmatprep.mubr.f32.mxu0 0.0
      %415 = vmatmul.mubr.f32.gmra.mrb[0].mxu0 %v283
      %v416 = vpop.f32.mrb[0].mxu0
      %v417 = vadd.f32 %v249, %v416
      %v418 = vpop.f32.mrb[0].mxu0
      %419 = vmatprep.mubr.f32.mxu0 0.0
      %420 = vmatmul.mubr.f32.gmra.mrb[0].mxu0 %v286
      %v421 = vpop.f32.mrb[0].mxu0
      %v422 = vadd.f32 %v249, %v421
      %v423 = vpop.f32.mrb[0].mxu0
      %424 = vmatprep.mubr.f32.mxu0 0.0
      %425 = vmatmul.mubr.f32.gmra.mrb[0].mxu0 %v289
      %v426 = vpop.f32.mrb[0].mxu0
      %v427 = vadd.f32 %v249, %v426
      %v428 = vpop.f32.mrb[0].mxu0
      %429 = vmatprep.mubr.f32.mxu0 0.0
      %430 = vmatmul.mubr.f32.gmra.mrb[0].mxu0 %v292
      %v431 = vpop.f32.mrb[0].mxu0
      %v432 = vadd.f32 %v249, %v431
      %v433 = vpop.f32.mrb[0].mxu0
      %434 = vmatprep.mubr.f32.mxu0 0.0
      %435 = vmatmul.mubr.f32.gmra.mrb[0].mxu0 %v295
      %v436 = vpop.f32.mrb[0].mxu0
      %v437 = vadd.f32 %v249, %v436
      %v438 = vpop.f32.mrb[0].mxu0
      %439 = vmatprep.mubr.f32.mxu0 0.0
      %440 = vmatmul.mubr.f32.gmra.mrb[0].mxu0 %v298
      %v441 = vpop.f32.mrb[0].mxu0
      %v442 = vadd.f32 %v249, %v441
      %v443 = vpop.f32.mrb[0].mxu0
      %444 = vdwg.mxu0
      %445 = vst.msk [vmem:[%s225] sm:$0xff] %vm251, %v367
      %446 = vst.msk [vmem:[%s225 + $0x8] sm:$0xff] %vm251, %v372
      %447 = vst.msk [vmem:[%s225 + $0x20] sm:$0xff] %vm251, %v377
      %448 = vst.msk [vmem:[%s225 + $0x28] sm:$0xff] %vm251, %v382
      %449 = vst.msk [vmem:[%s225 + $0x40] sm:$0xff] %vm251, %v387
      %450 = vst.msk [vmem:[%s225 + $0x48] sm:$0xff] %vm251, %v392
      %451 = vst.msk [vmem:[%s225 + $0x60] sm:$0xff] %vm251, %v397
      %452 = vst.msk [vmem:[%s225 + $0x68] sm:$0xff] %vm251, %v402
      %453 = vst.msk [vmem:[%s225 + $0x80] sm:$0xff] %vm251, %v407
      %454 = vst.msk [vmem:[%s225 + $0x88] sm:$0xff] %vm251, %v412
      %455 = vst.msk [vmem:[%s225 + $0xa0] sm:$0xff] %vm251, %v417
      %456 = vst.msk [vmem:[%s225 + $0xa8] sm:$0xff] %vm251, %v422
      %457 = vst.msk [vmem:[%s225 + $0xc0] sm:$0xff] %vm251, %v427
      %458 = vst.msk [vmem:[%s225 + $0xc8] sm:$0xff] %vm251, %v432
      %459 = vst.msk [vmem:[%s225 + $0xe0] sm:$0xff] %vm251, %v437
      %460 = vst.msk [vmem:[%s225 + $0xe8] sm:$0xff] %vm251, %v442
      %s461 = scalar_lea.vmem %s213, 8
      %v462 = vld [vmem:[%s461] sm:$0xff]
      %463 = vmatprep.subr.mxu0 0.0
      %464 = vmatpush1.msra.mxu0 %v462
      %465 = vmatprep.subr.mxu0 0.0
      %466 = vmatpush1.msra.mxu0 0.0
      %467 = vmatprep.subr.mxu0 0.0
      %468 = vmatpush1.msra.mxu0 0.0
      %469 = vmatprep.subr.mxu0 0.0
      %470 = vmatpush1.msra.mxu0 0.0
      %471 = vmatprep.subr.mxu0 0.0
      %472 = vmatpush1.msra.mxu0 0.0
      %473 = vmatprep.subr.mxu0 0.0
      %474 = vmatpush1.msra.mxu0 0.0
      %475 = vmatprep.subr.mxu0 0.0
      %476 = vmatpush1.msra.mxu0 0.0
      %477 = vmatprep.subr.mxu0 0.0
      %478 = vmatpush1.msra.mxu0 0.0
      %479 = vmatprep.subr.mxu0 0.0
      %480 = vmatpush1.msra.mxu0 0.0
      %481 = vmatprep.subr.mxu0 0.0
      %482 = vmatpush1.msra.mxu0 0.0
      %483 = vmatprep.subr.mxu0 0.0
      %484 = vmatpush1.msra.mxu0 0.0
      %485 = vmatprep.subr.mxu0 0.0
      %486 = vmatpush1.msra.mxu0 0.0
      %487 = vmatprep.subr.mxu0 0.0
      %488 = vmatpush1.msra.mxu0 0.0
      %489 = vmatprep.subr.mxu0 0.0
      %490 = vmatpush1.msra.mxu0 0.0
      %491 = vmatprep.subr.mxu0 0.0
      %492 = vmatpush1.msra.mxu0 0.0
      %493 = vmatprep.subr.mxu0 0.0
      %494 = vmatpush1.msra.mxu0 0.0
      %495 = vmatprep.subr.mxu0 0.0
      %496 = vmatpush1.msra.mxu0 0.0
      %497 = vmatprep.subr.mxu0 0.0
      %498 = vmatpush1.msra.mxu0 0.0
      %499 = vmatprep.subr.mxu0 0.0
      %500 = vmatpush1.msra.mxu0 0.0
      %501 = vmatprep.subr.mxu0 0.0
      %502 = vmatpush1.msra.mxu0 0.0
      %503 = vmatprep.subr.mxu0 0.0
      %504 = vmatpush1.msra.mxu0 0.0
      %505 = vmatprep.subr.mxu0 0.0
      %506 = vmatpush1.msra.mxu0 0.0
      %507 = vmatprep.subr.mxu0 0.0
      %508 = vmatpush1.msra.mxu0 0.0
      %509 = vmatprep.subr.mxu0 0.0
      %510 = vmatpush1.msra.mxu0 0.0
      %511 = vmatprep.subr.mxu0 0.0
      %512 = vmatpush1.msra.mxu0 0.0
      %513 = vmatprep.subr.mxu0 0.0
      %514 = vmatpush1.msra.mxu0 0.0
      %515 = vmatprep.subr.mxu0 0.0
      %516 = vmatpush1.msra.mxu0 0.0
      %517 = vmatprep.subr.mxu0 0.0
      %518 = vmatpush1.msra.mxu0 0.0
      %519 = vmatprep.subr.mxu0 0.0
      %520 = vmatpush1.msra.mxu0 0.0
      %521 = vmatprep.subr.mxu0 0.0
      %522 = vmatpush1.msra.mxu0 0.0
      %523 = vmatprep.subr.mxu0 0.0
      %524 = vmatpush1.msra.mxu0 0.0
      %525 = vmatprep.subr.mxu0 0.0
      %526 = vmatpush1.msra.mxu0 0.0
      %527 = vmatprep.mubr.f32.mxu0 0.0
      %528 = vmatmul.mubr.f32.gmra.mrb[0].mxu0 %v253
      %v529 = vpop.f32.mrb[0].mxu0
      %v530 = vadd.f32 %v249, %v529
      %v531 = vpop.f32.mrb[0].mxu0
      %532 = vmatprep.mubr.f32.mxu0 0.0
      %533 = vmatmul.mubr.f32.gmra.mrb[0].mxu0 %v256
      %v534 = vpop.f32.mrb[0].mxu0
      %v535 = vadd.f32 %v249, %v534
      %v536 = vpop.f32.mrb[0].mxu0
      %537 = vmatprep.mubr.f32.mxu0 0.0
      %538 = vmatmul.mubr.f32.gmra.mrb[0].mxu0 %v259
      %v539 = vpop.f32.mrb[0].mxu0
      %v540 = vadd.f32 %v249, %v539
      %v541 = vpop.f32.mrb[0].mxu0
      %542 = vmatprep.mubr.f32.mxu0 0.0
      %543 = vmatmul.mubr.f32.gmra.mrb[0].mxu0 %v262
      %v544 = vpop.f32.mrb[0].mxu0
      %v545 = vadd.f32 %v249, %v544
      %v546 = vpop.f32.mrb[0].mxu0
      %547 = vmatprep.mubr.f32.mxu0 0.0
      %548 = vmatmul.mubr.f32.gmra.mrb[0].mxu0 %v265
      %v549 = vpop.f32.mrb[0].mxu0
      %v550 = vadd.f32 %v249, %v549
      %v551 = vpop.f32.mrb[0].mxu0
      %552 = vmatprep.mubr.f32.mxu0 0.0
      %553 = vmatmul.mubr.f32.gmra.mrb[0].mxu0 %v268
      %v554 = vpop.f32.mrb[0].mxu0
      %v555 = vadd.f32 %v249, %v554
      %v556 = vpop.f32.mrb[0].mxu0
      %557 = vmatprep.mubr.f32.mxu0 0.0
      %558 = vmatmul.mubr.f32.gmra.mrb[0].mxu0 %v271
      %v559 = vpop.f32.mrb[0].mxu0
      %v560 = vadd.f32 %v249, %v559
      %v561 = vpop.f32.mrb[0].mxu0
      %562 = vmatprep.mubr.f32.mxu0 0.0
      %563 = vmatmul.mubr.f32.gmra.mrb[0].mxu0 %v274
      %v564 = vpop.f32.mrb[0].mxu0
      %v565 = vadd.f32 %v249, %v564
      %v566 = vpop.f32.mrb[0].mxu0
      %567 = vmatprep.mubr.f32.mxu0 0.0
      %568 = vmatmul.mubr.f32.gmra.mrb[0].mxu0 %v277
      %v569 = vpop.f32.mrb[0].mxu0
      %v570 = vadd.f32 %v249, %v569
      %v571 = vpop.f32.mrb[0].mxu0
      %572 = vmatprep.mubr.f32.mxu0 0.0
      %573 = vmatmul.mubr.f32.gmra.mrb[0].mxu0 %v280
      %v574 = vpop.f32.mrb[0].mxu0
      %v575 = vadd.f32 %v249, %v574
      %v576 = vpop.f32.mrb[0].mxu0
      %577 = vmatprep.mubr.f32.mxu0 0.0
      %578 = vmatmul.mubr.f32.gmra.mrb[0].mxu0 %v283
      %v579 = vpop.f32.mrb[0].mxu0
      %v580 = vadd.f32 %v249, %v579
      %v581 = vpop.f32.mrb[0].mxu0
      %582 = vmatprep.mubr.f32.mxu0 0.0
      %583 = vmatmul.mubr.f32.gmra.mrb[0].mxu0 %v286
      %v584 = vpop.f32.mrb[0].mxu0
      %v585 = vadd.f32 %v249, %v584
      %v586 = vpop.f32.mrb[0].mxu0
      %587 = vmatprep.mubr.f32.mxu0 0.0
      %588 = vmatmul.mubr.f32.gmra.mrb[0].mxu0 %v289
      %v589 = vpop.f32.mrb[0].mxu0
      %v590 = vadd.f32 %v249, %v589
      %v591 = vpop.f32.mrb[0].mxu0
      %592 = vmatprep.mubr.f32.mxu0 0.0
      %593 = vmatmul.mubr.f32.gmra.mrb[0].mxu0 %v292
      %v594 = vpop.f32.mrb[0].mxu0
      %v595 = vadd.f32 %v249, %v594
      %v596 = vpop.f32.mrb[0].mxu0
      %597 = vmatprep.mubr.f32.mxu0 0.0
      %598 = vmatmul.mubr.f32.gmra.mrb[0].mxu0 %v295
      %v599 = vpop.f32.mrb[0].mxu0
      %v600 = vadd.f32 %v249, %v599
      %v601 = vpop.f32.mrb[0].mxu0
      %602 = vmatprep.mubr.f32.mxu0 0.0
      %603 = vmatmul.mubr.f32.gmra.mrb[0].mxu0 %v298
      %v604 = vpop.f32.mrb[0].mxu0
      %v605 = vadd.f32 %v249, %v604
      %v606 = vpop.f32.mrb[0].mxu0
      %607 = vdwg.mxu0
      %s608 = scalar_lea.vmem %s225, 16
      %609 = vst.msk [vmem:[%s608] sm:$0xff] %vm251, %v530
      %610 = vst.msk [vmem:[%s608 + $0x8] sm:$0xff] %vm251, %v535
      %611 = vst.msk [vmem:[%s608 + $0x20] sm:$0xff] %vm251, %v540
      %612 = vst.msk [vmem:[%s608 + $0x28] sm:$0xff] %vm251, %v545
      %613 = vst.msk [vmem:[%s608 + $0x40] sm:$0xff] %vm251, %v550
      %614 = vst.msk [vmem:[%s608 + $0x48] sm:$0xff] %vm251, %v555
      %615 = vst.msk [vmem:[%s608 + $0x60] sm:$0xff] %vm251, %v560
      %616 = vst.msk [vmem:[%s608 + $0x68] sm:$0xff] %vm251, %v565
      %617 = vst.msk [vmem:[%s608 + $0x80] sm:$0xff] %vm251, %v570
      %618 = vst.msk [vmem:[%s608 + $0x88] sm:$0xff] %vm251, %v575
      %619 = vst.msk [vmem:[%s608 + $0xa0] sm:$0xff] %vm251, %v580
      %620 = vst.msk [vmem:[%s608 + $0xa8] sm:$0xff] %vm251, %v585
      %621 = vst.msk [vmem:[%s608 + $0xc0] sm:$0xff] %vm251, %v590
      %622 = vst.msk [vmem:[%s608 + $0xc8] sm:$0xff] %vm251, %v595
      %623 = vst.msk [vmem:[%s608 + $0xe0] sm:$0xff] %vm251, %v600
      %624 = vst.msk [vmem:[%s608 + $0xe8] sm:$0xff] %vm251, %v605
      %s625 = smul.u32 8, %s18
      %p626 = scmp.lt.s32.totalorder %s625, 31
      %s627 = scalar_select %p626, %s625, 31
      %p628 = scmp.lt.s32.totalorder %s19, 0
      %s629 = scalar_select %p628, %s19, 0
      %s630 = smul.addr %s627, 4
      %s631 = sadd.s32 %s629, %s630
      %s632 = smul.addr %s631, 8
      %s633 = scalar_lea.vmem %s3, %s632
      // Predicated region
      $region33: #{tpu_custom_call.1} parent=31 // pred_check
        %p634 = pneg %p124
      $region34: #{tpu_custom_call.1} parent=31 // pred_check_branch
        %636 = sbr.rel (%p634) target = $region36
      $region35: #{tpu_custom_call.1} parent=31 // pred_region
        %s637 = smul.u32 8, %s18
      $region36: #{tpu_custom_call.1} parent=31 // pred_fallthru
        _
    $region32: #{tpu_custom_call.1} parent=5 // pred_fallthru
      _
    %p638 = scmp.le.s32.totalorder 2, %s9
    // Predicated region
    $region37: #{tpu_custom_call.1} parent=5 // pred_check
      %p639 = pneg %p638
    $region38: #{tpu_custom_call.1} parent=5 // pred_check_branch
      %641 = sbr.rel (%p639) target = $region40
    $region39: #{tpu_custom_call.1} parent=5 // pred_region
      %s642 = ssub.s32 %s9, 2
      // Predicated region
      $region41: #{tpu_custom_call.1} parent=39 // pred_check
        %p643 = pneg %p130
      $region42: #{tpu_custom_call.1} parent=39 // pred_check_branch
        %645 = sbr.rel (%p643) target = $region44
      $region43: #{tpu_custom_call.1} parent=39 // pred_region
        %s646 = smul.u32 8, %s20
        %p647 = scmp.lt.s32.totalorder %s646, 31
        %s648 = scalar_select %p647, %s646, 31
        %p649 = scmp.lt.s32.totalorder %s21, 0
        %s650 = scalar_select %p649, %s21, 0
        %s651 = smul.addr %s648, 4
        %s652 = sadd.s32 %s650, %s651
        %s653 = smul.addr %s652, 8
        %s654 = scalar_lea.vmem %s3, %s653
      $region44: #{tpu_custom_call.1} parent=39 // pred_fallthru
        _
    $region40: #{tpu_custom_call.1} parent=5 // pred_fallthru
      _
  $region6: #{tpu_custom_call.1} parent=0 // loop_footer
    %s13 = sadd.s32 1, %s9
  $region7: #{tpu_custom_call.1} parent=0 // loop_footer_branch
    %8 = sbr.rel target = $region3
  $region8: #{tpu_custom_call.1} parent=0 // loop_exit
    _

</llo_original>
